<compile_context>
chip_gen: v5e
topology: v5e:2x2
jax: 0.10.0
libtpu: 0.0.40
codegen_flags: <defaults>
</compile_context>

<pallas_src>
import jax
import jax.numpy as jnp
from jax.experimental import pallas as pl
from jax.experimental.pallas import tpu as pltpu

N = 8      # nns.N in the original module (rows per half)
F = 256    # feature width per row (multiple of 128 -> lane-dense layout)
EPS = 0.1


def _wavg_kernel(w_ref, x_ref, o_ref):
    # w_ref: SMEM (2,) scalars; x_ref: VMEM (2, N, F); o_ref: VMEM (N, F).
    w0 = w_ref[0]
    w1 = w_ref[1]
    o_ref[...] = w0 * x_ref[0] + w1 * x_ref[1]


def weighted_averaging_learner(x, weight):
    """x: (2*N, F) float32, weight: (2,) float32 -> (N, F) float32."""
    two_n, f = x.shape
    n = two_n // 2
    assert two_n == 2 * n, "x must stack exactly two (N, F) halves along dim 0"

    # Contiguous, zero-cost reshape: halves become x3[0] and x3[1].
    x3 = x.reshape(2, n, f)

    return pl.pallas_call(
        _wavg_kernel,
        out_shape=jax.ShapeDtypeStruct((n, f), x.dtype),
        in_specs=[
            pl.BlockSpec(memory_space=pltpu.MemorySpace.SMEM),   # weights
            pl.BlockSpec(memory_space=pltpu.MemorySpace.VMEM),   # x (both halves)
        ],
        out_specs=pl.BlockSpec(memory_space=pltpu.MemorySpace.VMEM),
    )(weight, x3)


if __name__ == "__main__":
    key = jax.random.PRNGKey(0)
    x = jax.random.normal(key, (2 * N, F), dtype=jnp.float32)

    # Deterministic parameter init, exactly as the module's __init__.
    weight = jnp.array([1.0 - EPS, EPS], dtype=jnp.float32)

    out = weighted_averaging_learner(x, weight)
    out = jax.block_until_ready(out)

    # Reference check against plain JAX.
    ref = weight[0] * x[:N] + weight[1] * x[N:]
    assert out.shape == (N, F)
    assert jnp.allclose(out, ref, atol=1e-6, rtol=1e-6), "mismatch vs reference"

    print("KERNEL_OK")
</pallas_src>

<mosaic_0001>
module attributes {stable_mosaic.version = 11 : i64} {
  func.func @_wavg_kernel(%arg0: memref<2xf32, #tpu.memory_space<smem>>, %arg1: memref<2x8x256xf32, #tpu.memory_space<vmem>>, %arg2: memref<8x256xf32, #tpu.memory_space<vmem>>) attributes {dimension_semantics = [], scalar_prefetch = 0 : i64, scratch_operands = 0 : i64, tpu.core_type = #tpu.core_type<tc>} {
    %c0 = arith.constant 0 : index
    %0 = memref.load %arg0[%c0] : memref<2xf32, #tpu.memory_space<smem>>
    %c1 = arith.constant 1 : index
    %1 = memref.load %arg0[%c1] : memref<2xf32, #tpu.memory_space<smem>>
    %c0_0 = arith.constant 0 : index
    %c0_1 = arith.constant 0 : index
    %c0_2 = arith.constant 0 : index
    %2 = vector.load %arg1[%c0_0, %c0_1, %c0_2] : memref<2x8x256xf32, #tpu.memory_space<vmem>>, vector<1x8x256xf32>
    %3 = vector.shape_cast %2 : vector<1x8x256xf32> to vector<8x256xf32>
    %4 = vector.broadcast %0 : f32 to vector<8x256xf32>
    %5 = arith.mulf %4, %3 : vector<8x256xf32>
    %c1_3 = arith.constant 1 : index
    %c0_4 = arith.constant 0 : index
    %c0_5 = arith.constant 0 : index
    %6 = vector.load %arg1[%c1_3, %c0_4, %c0_5] : memref<2x8x256xf32, #tpu.memory_space<vmem>>, vector<1x8x256xf32>
    %7 = vector.shape_cast %6 : vector<1x8x256xf32> to vector<8x256xf32>
    %8 = vector.broadcast %1 : f32 to vector<8x256xf32>
    %9 = arith.mulf %8, %7 : vector<8x256xf32>
    %10 = arith.addf %5, %9 : vector<8x256xf32>
    %c0_6 = arith.constant 0 : index
    %c0_7 = arith.constant 0 : index
    %11 = vector.load %arg2[%c0_6, %c0_7] : memref<8x256xf32, #tpu.memory_space<vmem>>, vector<8x256xf32>
    tpu.vector_store %arg2[%c0_6, %c0_7], %10 {strides = array<i32>} : memref<8x256xf32, #tpu.memory_space<vmem>>, vector<8x256xf32>,
    return
  }
}

</mosaic_0001>

<llo_original>
// kernel: tpu_custom_call.1
$region0: #{tpu_custom_call.1}
  #allocation0 [shape = 'u32[]', space=smem, size = 0x4, offset = 0x4, fixed_abs, tag = 'smem constant byte address 0x4 - core index']
  #allocation1 [shape = 'u32[72,128]{1,0:T(1,128)}', space=vmem, size = 0x9000, scoped, tag = 'internal scratch']
  %s0 = inlined_call_operand.hbm [shape: f32[2], index: 0, kind: input, shape index: {}]
  %s1 = inlined_call_operand.hbm [shape: f32[2,8,256], index: 1, kind: input, shape index: {}]
  %s2 = inlined_call_operand.hbm [shape: f32[8,256], index: 2, kind: output, shape index: {}]
  %s3 = sld [smem:[#allocation0]]
  $region26: #{tpu_custom_call.1} parent=0
    _
  %s5 = ssub.s32 1, %s3
  %s6 = scalar_select 0, %s5, %s3
  $region1: #{tpu_custom_call.1} parent=0
    #allocation2 [shape = 'u8[512]{0}', space=smem, size = 0x200, scoped, tag = 'input window, operand 0, single buffered']
    #allocation3 [shape = 's32[1]{0}', space=sflag, size = 0x4, scoped, tag = 'scoped memory for tpu_custom_call.1']
    #allocation4 [shape = 's32[1]{0}', space=sflag, size = 0x4, scoped, tag = 'scoped memory for tpu_custom_call.1']
    #allocation5 [shape = 's32[1]{0}', space=sflag, size = 0x4, scoped, tag = 'scoped memory for tpu_custom_call.1']
    #allocation6 [shape = 'u8[16384]{0}', space=vmem, size = 0x4000, scoped, tag = 'input window, operand 1, single buffered']
    #allocation7 [shape = 'u8[8192]{0}', space=vmem, size = 0x2000, scoped, tag = 'output window, operand 0, single buffered']
    %7 = vsyncpa [#allocation5], 0
    %8 = vsyncpa [#allocation3], 0
    %9 = vsyncpa [#allocation4], 0
    // Predicated region
    $region2: #{tpu_custom_call.1} parent=1 // pred_check
      _
    $region3: #{tpu_custom_call.1} parent=1 // pred_check_branch
      %11 = sbr.rel (0) target = $region5
    $region4: #{tpu_custom_call.1} parent=1 // pred_region
      %13 = vsyncadd [#allocation5], 0
      %s15 = sshll.u32 %s0, 4
      %s16 = int_to_ptr.hbm [resolvable:$true] %s15
      %18 = dma.hbm_to_smem %s16, 16, [#allocation2], [#allocation5]
    $region5: #{tpu_custom_call.1} parent=1 // pred_fallthru
      _
    // Predicated region
    $region6: #{tpu_custom_call.1} parent=1 // pred_check
      _
    $region7: #{tpu_custom_call.1} parent=1 // pred_check_branch
      %20 = sbr.rel (0) target = $region9
    $region8: #{tpu_custom_call.1} parent=1 // pred_region
      %22 = vsyncadd [#allocation3], 0
      %s23 = sshll.u32 %s1, 4
      %s24 = int_to_ptr.hbm [resolvable:$true] %s23
      %s25 = sshll.u32 [#allocation6], 4
      %s26 = int_to_ptr.vmem [resolvable:$true] %s25
      %31 = dma.hbm_to_vmem [thread:$0]  %s24, 512, %s26, [#allocation3], 256, 256, 16
    $region9: #{tpu_custom_call.1} parent=1 // pred_fallthru
      _
    // Predicated region
    $region10: #{tpu_custom_call.1} parent=1 // pred_check
      _
    $region11: #{tpu_custom_call.1} parent=1 // pred_check_branch
      %33 = sbr.rel (0) target = $region13
    $region12: #{tpu_custom_call.1} parent=1 // pred_region
      %35 = dma.done [#allocation5], 16
    $region13: #{tpu_custom_call.1} parent=1 // pred_fallthru
      _
    // Predicated region
    $region14: #{tpu_custom_call.1} parent=1 // pred_check
      _
    $region15: #{tpu_custom_call.1} parent=1 // pred_check_branch
      %37 = sbr.rel (0) target = $region17
    $region16: #{tpu_custom_call.1} parent=1 // pred_region
      %39 = dma.done [#allocation3], 512
    $region17: #{tpu_custom_call.1} parent=1 // pred_fallthru
      _
    %40 = sfence
    %s41 = sld [smem:[#allocation2]]
    %s42 = sld [smem:[#allocation2 + $0x1]]
    %v43 = vld [vmem:[#allocation6] sm:$0xff]
    %v44 = vld [vmem:[#allocation6 + $0x8] sm:$0xff]
    %v45 = vstv %s41
    %v46 = vmul.f32 %v45, %v43
    %v47 = vmul.f32 %v45, %v44
    %s48 = scalar_lea.vmem [#allocation6], 16
    %v49 = vld [vmem:[%s48] sm:$0xff]
    %v50 = vld [vmem:[%s48 + $0x8] sm:$0xff]
    %v51 = vstv %s42
    %v52 = vmul.f32 %v51, %v49
    %v53 = vmul.f32 %v51, %v50
    %v54 = vadd.f32 %v46, %v52
    %v55 = vadd.f32 %v47, %v53
    %56 = vst [vmem:[#allocation7] sm:$0xff] %v54
    %57 = vst [vmem:[#allocation7 + $0x8] sm:$0xff] %v55
    // Predicated region
    $region18: #{tpu_custom_call.1} parent=1 // pred_check
      _
    $region19: #{tpu_custom_call.1} parent=1 // pred_check_branch
      %59 = sbr.rel (0) target = $region21
    $region20: #{tpu_custom_call.1} parent=1 // pred_region
      %61 = vsyncadd [#allocation4], 0
      %s63 = sshll.u32 [#allocation7], 4
      %s64 = int_to_ptr.vmem [resolvable:$true] %s63
      %s65 = sshll.u32 %s2, 4
      %s66 = int_to_ptr.hbm [resolvable:$true] %s65
      %68 = dma.vmem_to_hbm [thread:$0]  %s64, 256, %s66, [#allocation4]
    $region21: #{tpu_custom_call.1} parent=1 // pred_fallthru
      _
    // Predicated region
    $region22: #{tpu_custom_call.1} parent=1 // pred_check
      _
    $region23: #{tpu_custom_call.1} parent=1 // pred_check_branch
      %70 = sbr.rel (0) target = $region25
    $region24: #{tpu_custom_call.1} parent=1 // pred_region
      %72 = dma.done [#allocation4], 256
    $region25: #{tpu_custom_call.1} parent=1 // pred_fallthru
      _
    %73 = vsyncpa [#allocation3], 1
    %74 = vsyncpa [#allocation4], 1
    %75 = vsyncpa [#allocation5], 1

</llo_original>
